<compile_context>
chip_gen: v7x
topology: tpu7x:2x2x1
jax: 0.10.0
libtpu: 0.0.40
codegen_flags: <defaults>
</compile_context>

<pallas_src>
import functools

import jax
import jax.numpy as jnp
from jax.experimental import pallas as pl
from jax.experimental.pallas import tpu as pltpu


def _round_up(x, m):
    return ((x + m - 1) // m) * m


def _make_grach_conv_kernel(layer_dims):
    """Build the fused kernel for a fixed (trace-time) list of (in_i, out_i)."""

    def kernel(adj_ref, x_ref, params_ref, out_ref):
        adj = adj_ref[...].astype(jnp.float32)
        h = x_ref[...].astype(jnp.float32)

        # Unrolled at trace time into one fused chain of
        #   relu((adj @ h) @ W_i + b_i)
        # per layer, all f32-accumulated on the MXU.
        col = 0
        for fan_in, fan_out in layer_dims:
            w = params_ref[0:fan_in, col:col + fan_out]            # [in_i, out_i]
            b = params_ref[fan_in:fan_in + 1, col:col + fan_out]   # [1, out_i]
            # Keep (adj @ h) @ W order -- do NOT rewrite as adj @ (h @ W):
            # with in_i <= out_i this order minimizes FLOPs / MXU passes.
            h = jnp.dot(adj, h, preferred_element_type=jnp.float32)
            h = jnp.dot(h, w, preferred_element_type=jnp.float32) + b
            h = jnp.maximum(h, 0.0)
            col += fan_out

        # Fold torch.moveaxis(x, -2, -1) into the kernel: a tiny in-kernel
        # transpose + store instead of a second XLA dispatch afterwards.
        out_ref[...] = h.T.astype(out_ref.dtype)

    return kernel


def pack_params(weights, biases):
    """Pack all (W_i, b_i) into one f32 slab (single HBM->VMEM DMA).

    Layer i occupies columns [c_i, c_i + out_i):
      rows [0, in_i)        hold W_i  (stored [in, out] == torch weight.T)
      row  in_i             holds b_i
    Returns (slab, layer_dims) with layer_dims a static tuple of (in_i, out_i).
    """
    assert len(weights) == len(biases)
    layer_dims = tuple((int(w.shape[0]), int(w.shape[1])) for w in weights)
    rows = _round_up(max(fi + 1 for fi, _ in layer_dims), 8)
    cols = sum(fo for _, fo in layer_dims)
    slab = jnp.zeros((rows, cols), jnp.float32)
    c = 0
    for (fi, fo), w, b in zip(layer_dims, weights, biases):
        slab = slab.at[0:fi, c:c + fo].set(jnp.asarray(w, jnp.float32))
        slab = slab.at[fi:fi + 1, c:c + fo].set(
            jnp.asarray(b, jnp.float32).reshape(1, fo))
        c += fo
    return slab, layer_dims


@functools.partial(jax.jit, static_argnames=("layer_dims",))
def _grach_conv_call(adj, x, params, layer_dims):
    n = adj.shape[0]
    out_dim = layer_dims[-1][1]
    vmem = pl.BlockSpec(memory_space=pltpu.MemorySpace.VMEM)
    return pl.pallas_call(
        _make_grach_conv_kernel(layer_dims),
        out_shape=jax.ShapeDtypeStruct((out_dim, n), jnp.float32),
        in_specs=[vmem, vmem, vmem],   # gridless: whole operands resident in VMEM
        out_specs=vmem,
    )(adj, x, params)


def grach_conv_forward(adj, x, weights, biases):
    """adj: [n, n]; x: [n, 3]; weights[i]: [in_i, out_i]; biases[i]: [1, out_i].

    Returns [out_last, n]  (== torch.moveaxis(result, -2, -1)).
    """
    params, layer_dims = pack_params(weights, biases)
    return _grach_conv_call(jnp.asarray(adj, jnp.float32),
                            jnp.asarray(x, jnp.float32),
                            params, layer_dims)


def init_grach_conv_params(key, n, conv_hidden):
    """Deterministic synthetic parameters (shapes match grach_conv.__init__)."""
    dims = [3] + list(conv_hidden)
    num_layers = len(dims) - 1
    ks = jax.random.split(key, 2 * num_layers + 1)

    # Random 0/1 adjacency with self-loops, as a stand-in for the user-provided
    # adj_matrix (the module just does adj_matrix.float()).
    adj = jax.random.bernoulli(ks[0], 0.5, (n, n)).astype(jnp.float32)
    adj = jnp.maximum(adj, jnp.eye(n, dtype=jnp.float32))

    weights, biases = [], []
    for i in range(num_layers):
        fan_in, fan_out = dims[i], dims[i + 1]
        bound = 1.0 / jnp.sqrt(jnp.float32(fan_in))
        w = jax.random.uniform(ks[2 * i + 1], (fan_in, fan_out), jnp.float32,
                               -bound, bound)
        b = jax.random.uniform(ks[2 * i + 2], (1, fan_out), jnp.float32,
                               -bound, bound)
        weights.append(w)
        biases.append(b)
    return adj, weights, biases


def grach_conv_reference(adj, x, weights, biases):
    """Pure-JAX reference for correctness checking."""
    h = x
    for w, b in zip(weights, biases):
        h = adj @ h
        h = h @ w + b
        h = jax.nn.relu(h)
    return jnp.swapaxes(h, -2, -1)


if __name__ == "__main__":
    n_nodes = 8              # number of graph nodes (adj is [n, n])
    conv_hidden = [16, 32]   # module prepends the fixed input size 3

    key = jax.random.PRNGKey(0)
    k_params, k_x = jax.random.split(key)

    adj, weights, biases = init_grach_conv_params(k_params, n_nodes, conv_hidden)
    x = jax.random.normal(k_x, (n_nodes, 3), jnp.float32)

    out = grach_conv_forward(adj, x, weights, biases)
    jax.block_until_ready(out)

    ref = grach_conv_reference(adj, x, weights, biases)
    assert out.shape == (conv_hidden[-1], n_nodes), out.shape
    assert jnp.allclose(out, ref, atol=1e-5, rtol=1e-5)

    print("KERNEL_OK")
</pallas_src>

<mosaic_0001>
module attributes {stable_mosaic.version = 11 : i64} {
  func.func @kernel(%arg0: memref<8x8xf32, #tpu.memory_space<vmem>>, %arg1: memref<8x3xf32, #tpu.memory_space<vmem>>, %arg2: memref<24x48xf32, #tpu.memory_space<vmem>>, %arg3: memref<32x8xf32, #tpu.memory_space<vmem>>) attributes {dimension_semantics = [], scalar_prefetch = 0 : i64, scratch_operands = 0 : i64, tpu.core_type = #tpu.core_type<tc>} {
    %c0 = arith.constant 0 : index
    %c0_0 = arith.constant 0 : index
    %0 = vector.load %arg0[%c0, %c0_0] : memref<8x8xf32, #tpu.memory_space<vmem>>, vector<8x8xf32>
    %c0_1 = arith.constant 0 : index
    %c0_2 = arith.constant 0 : index
    %1 = vector.load %arg1[%c0_1, %c0_2] : memref<8x3xf32, #tpu.memory_space<vmem>>, vector<8x3xf32>
    %c0_3 = arith.constant 0 : index
    %c0_4 = arith.constant 0 : index
    %2 = vector.load %arg2[%c0_3, %c0_4] : memref<24x48xf32, #tpu.memory_space<vmem>>, vector<3x16xf32>
    %c3 = arith.constant 3 : index
    %c0_5 = arith.constant 0 : index
    %3 = vector.load %arg2[%c3, %c0_5] : memref<24x48xf32, #tpu.memory_space<vmem>>, vector<1x16xf32>
    %cst = arith.constant dense<0.000000e+00> : vector<8x3xf32>
    %4 = tpu.matmul %0, %1, %cst {dimension_numbers = #tpu.dot_dimension_numbers<[1], [0], [0], [1], [0, 0, 1, 1], [], []>} : vector<8x8xf32>, vector<8x3xf32>, vector<8x3xf32> -> vector<8x3xf32>
    %cst_6 = arith.constant dense<0.000000e+00> : vector<8x16xf32>
    %5 = tpu.matmul %4, %2, %cst_6 {dimension_numbers = #tpu.dot_dimension_numbers<[1], [0], [0], [1], [0, 0, 1, 1], [], []>} : vector<8x3xf32>, vector<3x16xf32>, vector<8x16xf32> -> vector<8x16xf32>
    %6 = vector.broadcast %3 : vector<1x16xf32> to vector<8x16xf32>
    %7 = arith.addf %5, %6 : vector<8x16xf32>
    %cst_7 = arith.constant 0.000000e+00 : f32
    %8 = vector.broadcast %cst_7 : f32 to vector<8x16xf32>
    %9 = arith.maximumf %7, %8 : vector<8x16xf32>
    %c0_8 = arith.constant 0 : index
    %c16 = arith.constant 16 : index
    %10 = vector.load %arg2[%c0_8, %c16] : memref<24x48xf32, #tpu.memory_space<vmem>>, vector<16x32xf32>
    %c16_9 = arith.constant 16 : index
    %c16_10 = arith.constant 16 : index
    %11 = vector.load %arg2[%c16_9, %c16_10] : memref<24x48xf32, #tpu.memory_space<vmem>>, vector<1x32xf32>
    %cst_11 = arith.constant dense<0.000000e+00> : vector<8x16xf32>
    %12 = tpu.matmul %0, %9, %cst_11 {dimension_numbers = #tpu.dot_dimension_numbers<[1], [0], [0], [1], [0, 0, 1, 1], [], []>} : vector<8x8xf32>, vector<8x16xf32>, vector<8x16xf32> -> vector<8x16xf32>
    %cst_12 = arith.constant dense<0.000000e+00> : vector<8x32xf32>
    %13 = tpu.matmul %12, %10, %cst_12 {dimension_numbers = #tpu.dot_dimension_numbers<[1], [0], [0], [1], [0, 0, 1, 1], [], []>} : vector<8x16xf32>, vector<16x32xf32>, vector<8x32xf32> -> vector<8x32xf32>
    %14 = vector.broadcast %11 : vector<1x32xf32> to vector<8x32xf32>
    %15 = arith.addf %13, %14 : vector<8x32xf32>
    %cst_13 = arith.constant 0.000000e+00 : f32
    %16 = vector.broadcast %cst_13 : f32 to vector<8x32xf32>
    %17 = arith.maximumf %15, %16 : vector<8x32xf32>
    %18 = tpu.transpose %17, [1, 0] : vector<8x32xf32> -> vector<32x8xf32>
    %c0_14 = arith.constant 0 : index
    %c0_15 = arith.constant 0 : index
    %19 = vector.load %arg3[%c0_14, %c0_15] : memref<32x8xf32, #tpu.memory_space<vmem>>, vector<32x8xf32>
    tpu.vector_store %arg3[%c0_14, %c0_15], %18 {strides = array<i32>} : memref<32x8xf32, #tpu.memory_space<vmem>>, vector<32x8xf32>,
    return
  }
}

</mosaic_0001>

<llo_original>
// kernel: _grach_conv_call.1
$region0: #{_grach_conv_call.1}
  #allocation0 [shape = 'u32[]', space=smem, size = 0x4, offset = 0x4, fixed_abs, tag = 'smem constant byte address 0x4 - core index']
  #allocation1 [shape = 'u32[144,128]{1,0:T(1,128)}', space=vmem, size = 0x12000, scoped, tag = 'internal scratch']
  %s0 = inlined_call_operand.vmem [shape: f32[8,8], index: 0, kind: input, shape index: {}]
  %s1 = inlined_call_operand.vmem [shape: f32[8,3], index: 1, kind: input, shape index: {}]
  %s2 = inlined_call_operand.hbm [shape: f32[24,48], index: 2, kind: input, shape index: {}]
  %s3 = inlined_call_operand.vmem [shape: f32[32,8], index: 3, kind: output, shape index: {}]
  %s4 = sld [smem:[#allocation0]]
  $region26: #{_grach_conv_call.1} parent=0
    _
  %s6 = ssub.s32 1, %s4
  %s7 = scalar_select 0, %s6, %s4
  $region1: #{_grach_conv_call.1} parent=0
    #allocation2 [shape = 'u8[12288]{0}', space=vmem, size = 0x3000, scoped, tag = 'input window, operand 2, single buffered']
    #allocation3 [shape = 's32[1]{0}', space=sflag, size = 0x4, scoped, tag = 'scoped memory for _grach_conv_call.1']
    %8 = vsyncpa [#allocation3], 0
    // Predicated region
    $region2: #{_grach_conv_call.1} parent=1 // pred_check
      _
    $region3: #{_grach_conv_call.1} parent=1 // pred_check_branch
      %10 = sbr.rel (0) target = $region5
    $region4: #{_grach_conv_call.1} parent=1 // pred_region
      _
    $region5: #{_grach_conv_call.1} parent=1 // pred_fallthru
      _
    // Predicated region
    $region6: #{_grach_conv_call.1} parent=1 // pred_check
      _
    $region7: #{_grach_conv_call.1} parent=1 // pred_check_branch
      %12 = sbr.rel (0) target = $region9
    $region8: #{_grach_conv_call.1} parent=1 // pred_region
      _
    $region9: #{_grach_conv_call.1} parent=1 // pred_fallthru
      _
    // Predicated region
    $region10: #{_grach_conv_call.1} parent=1 // pred_check
      _
    $region11: #{_grach_conv_call.1} parent=1 // pred_check_branch
      %14 = sbr.rel (0) target = $region13
    $region12: #{_grach_conv_call.1} parent=1 // pred_region
      %s16 = ssub.s32 384, 384
      %17 = vsyncadd [#allocation3], %s16
      %s18 = sshll.u32 [#allocation2], 4
      %s19 = int_to_ptr.vmem [resolvable:$true] %s18
      %24 = dma.hbm_to_vmem [thread:$0]  %s2, 384, %s19, [#allocation3], 128, 128, 8
    $region13: #{_grach_conv_call.1} parent=1 // pred_fallthru
      _
    // Predicated region
    $region14: #{_grach_conv_call.1} parent=1 // pred_check
      _
    $region15: #{_grach_conv_call.1} parent=1 // pred_check_branch
      %26 = sbr.rel (0) target = $region17
    $region16: #{_grach_conv_call.1} parent=1 // pred_region
      %27 = dma.done [#allocation3], 384
    $region17: #{_grach_conv_call.1} parent=1 // pred_fallthru
      _
    %v28 = vld [vmem:[%s0] sm:$0xff]
    %v29 = vld [vmem:[%s1] sm:$0xff]
    %v30 = vld [vmem:[#allocation2] sm:$0x7]
    %v31 = vld [vmem:[#allocation2 + $0x3] sm:$0x1]
    %vm32 = vcmask 64512
    %v34 = vsel %vm32, %v28, 0
    %36 = vmatprep.subr.mxu0 0.0
    %37 = vmatpush1.msra.mxu0 %v29
    %38 = vmatprep.subr.mxu0 0.0
    %39 = vmatpush1.msra.mxu0 0.0
    %40 = vmatprep.subr.mxu0 0.0
    %41 = vmatpush1.msra.mxu0 0.0
    %42 = vmatprep.subr.mxu0 0.0
    %43 = vmatpush1.msra.mxu0 0.0
    %44 = vmatprep.subr.mxu0 0.0
    %45 = vmatpush1.msra.mxu0 0.0
    %46 = vmatprep.subr.mxu0 0.0
    %47 = vmatpush1.msra.mxu0 0.0
    %48 = vmatprep.subr.mxu0 0.0
    %49 = vmatpush1.msra.mxu0 0.0
    %50 = vmatprep.subr.mxu0 0.0
    %51 = vmatpush1.msra.mxu0 0.0
    %52 = vmatprep.subr.mxu0 0.0
    %53 = vmatpush1.msra.mxu0 0.0
    %54 = vmatprep.subr.mxu0 0.0
    %55 = vmatpush1.msra.mxu0 0.0
    %56 = vmatprep.subr.mxu0 0.0
    %57 = vmatpush1.msra.mxu0 0.0
    %58 = vmatprep.subr.mxu0 0.0
    %59 = vmatpush1.msra.mxu0 0.0
    %60 = vmatprep.subr.mxu0 0.0
    %61 = vmatpush1.msra.mxu0 0.0
    %62 = vmatprep.subr.mxu0 0.0
    %63 = vmatpush1.msra.mxu0 0.0
    %64 = vmatprep.subr.mxu0 0.0
    %65 = vmatpush1.msra.mxu0 0.0
    %66 = vmatprep.subr.mxu0 0.0
    %67 = vmatpush1.msra.mxu0 0.0
    %68 = vmatprep.subr.mxu0 0.0
    %69 = vmatpush1.msra.mxu0 0.0
    %70 = vmatprep.subr.mxu0 0.0
    %71 = vmatpush1.msra.mxu0 0.0
    %72 = vmatprep.subr.mxu0 0.0
    %73 = vmatpush1.msra.mxu0 0.0
    %74 = vmatprep.subr.mxu0 0.0
    %75 = vmatpush1.msra.mxu0 0.0
    %76 = vmatprep.subr.mxu0 0.0
    %77 = vmatpush1.msra.mxu0 0.0
    %78 = vmatprep.subr.mxu0 0.0
    %79 = vmatpush1.msra.mxu0 0.0
    %80 = vmatprep.subr.mxu0 0.0
    %81 = vmatpush1.msra.mxu0 0.0
    %82 = vmatprep.subr.mxu0 0.0
    %83 = vmatpush1.msra.mxu0 0.0
    %84 = vmatprep.subr.mxu0 0.0
    %85 = vmatpush1.msra.mxu0 0.0
    %86 = vmatprep.subr.mxu0 0.0
    %87 = vmatpush1.msra.mxu0 0.0
    %88 = vmatprep.subr.mxu0 0.0
    %89 = vmatpush1.msra.mxu0 0.0
    %90 = vmatprep.subr.mxu0 0.0
    %91 = vmatpush1.msra.mxu0 0.0
    %92 = vmatprep.subr.mxu0 0.0
    %93 = vmatpush1.msra.mxu0 0.0
    %94 = vmatprep.subr.mxu0 0.0
    %95 = vmatpush1.msra.mxu0 0.0
    %96 = vmatprep.subr.mxu0 0.0
    %97 = vmatpush1.msra.mxu0 0.0
    %98 = vmatprep.subr.mxu0 0.0
    %99 = vmatpush1.msra.mxu0 0.0
    %100 = vmatprep.mubr.f32.mxu0 0.0
    %101 = vmatmul.mubr.f32.gmra.mrb[0].mxu0 %v34
    %v102 = vpop.f32.mrb[0].mxu0
    %v103 = vadd.f32 0.0, %v102
    %v104 = vpop.f32.mrb[0].mxu0
    %105 = vdwg.mxu0
    %v106 = vlaneseq
    %v107 = vshrl.u32 %v106, 7
    %v108 = vsub.s32 0, %v107
    %v109 = vrot.slane %v31, %v108
    %vm110 = vcmask 23552
    %v112 = vsel %vm110, %v103, 0
    %vm114 = vcmask 1042432
    %v116 = vsel %vm114, %v30, 0
    %118 = vmatprep.subr.mxu0 0.0
    %119 = vmatpush1.msra.mxu0 %v116
    %120 = vmatprep.subr.mxu0 0.0
    %121 = vmatpush1.msra.mxu0 0.0
    %122 = vmatprep.subr.mxu0 0.0
    %123 = vmatpush1.msra.mxu0 0.0
    %124 = vmatprep.subr.mxu0 0.0
    %125 = vmatpush1.msra.mxu0 0.0
    %126 = vmatprep.subr.mxu0 0.0
    %127 = vmatpush1.msra.mxu0 0.0
    %128 = vmatprep.subr.mxu0 0.0
    %129 = vmatpush1.msra.mxu0 0.0
    %130 = vmatprep.subr.mxu0 0.0
    %131 = vmatpush1.msra.mxu0 0.0
    %132 = vmatprep.subr.mxu0 0.0
    %133 = vmatpush1.msra.mxu0 0.0
    %134 = vmatprep.subr.mxu0 0.0
    %135 = vmatpush1.msra.mxu0 0.0
    %136 = vmatprep.subr.mxu0 0.0
    %137 = vmatpush1.msra.mxu0 0.0
    %138 = vmatprep.subr.mxu0 0.0
    %139 = vmatpush1.msra.mxu0 0.0
    %140 = vmatprep.subr.mxu0 0.0
    %141 = vmatpush1.msra.mxu0 0.0
    %142 = vmatprep.subr.mxu0 0.0
    %143 = vmatpush1.msra.mxu0 0.0
    %144 = vmatprep.subr.mxu0 0.0
    %145 = vmatpush1.msra.mxu0 0.0
    %146 = vmatprep.subr.mxu0 0.0
    %147 = vmatpush1.msra.mxu0 0.0
    %148 = vmatprep.subr.mxu0 0.0
    %149 = vmatpush1.msra.mxu0 0.0
    %150 = vmatprep.subr.mxu0 0.0
    %151 = vmatpush1.msra.mxu0 0.0
    %152 = vmatprep.subr.mxu0 0.0
    %153 = vmatpush1.msra.mxu0 0.0
    %154 = vmatprep.subr.mxu0 0.0
    %155 = vmatpush1.msra.mxu0 0.0
    %156 = vmatprep.subr.mxu0 0.0
    %157 = vmatpush1.msra.mxu0 0.0
    %158 = vmatprep.subr.mxu0 0.0
    %159 = vmatpush1.msra.mxu0 0.0
    %160 = vmatprep.subr.mxu0 0.0
    %161 = vmatpush1.msra.mxu0 0.0
    %162 = vmatprep.subr.mxu0 0.0
    %163 = vmatpush1.msra.mxu0 0.0
    %164 = vmatprep.subr.mxu0 0.0
    %165 = vmatpush1.msra.mxu0 0.0
    %166 = vmatprep.subr.mxu0 0.0
    %167 = vmatpush1.msra.mxu0 0.0
    %168 = vmatprep.subr.mxu0 0.0
    %169 = vmatpush1.msra.mxu0 0.0
    %170 = vmatprep.subr.mxu0 0.0
    %171 = vmatpush1.msra.mxu0 0.0
    %172 = vmatprep.subr.mxu0 0.0
    %173 = vmatpush1.msra.mxu0 0.0
    %174 = vmatprep.subr.mxu0 0.0
    %175 = vmatpush1.msra.mxu0 0.0
    %176 = vmatprep.subr.mxu0 0.0
    %177 = vmatpush1.msra.mxu0 0.0
    %178 = vmatprep.subr.mxu0 0.0
    %179 = vmatpush1.msra.mxu0 0.0
    %180 = vmatprep.subr.mxu0 0.0
    %181 = vmatpush1.msra.mxu0 0.0
    %182 = vmatprep.mubr.f32.mxu0 0.0
    %183 = vmatmul.mubr.f32.gmra.mrb[0].mxu0 %v112
    %v184 = vpop.f32.mrb[0].mxu0
    %v185 = vadd.f32 %v109, %v184
    %v186 = vpop.f32.mrb[0].mxu0
    %187 = vdwg.mxu0
    %v188 = vmax.f32 %v185, 0.0
    %v189 = vld [vmem:[#allocation2] sm:$0xff]
    %v190 = vld [vmem:[#allocation2 + $0x8] sm:$0xff]
    %v191 = vld [vmem:[#allocation2 + $0x10] sm:$0x1]
    %192 = vmatprep.subr.mxu0 0.0
    %193 = vmatpush1.msra.mxu0 %v188
    %194 = vmatprep.subr.mxu0 0.0
    %195 = vmatpush1.msra.mxu0 0.0
    %196 = vmatprep.subr.mxu0 0.0
    %197 = vmatpush1.msra.mxu0 0.0
    %198 = vmatprep.subr.mxu0 0.0
    %199 = vmatpush1.msra.mxu0 0.0
    %200 = vmatprep.subr.mxu0 0.0
    %201 = vmatpush1.msra.mxu0 0.0
    %202 = vmatprep.subr.mxu0 0.0
    %203 = vmatpush1.msra.mxu0 0.0
    %204 = vmatprep.subr.mxu0 0.0
    %205 = vmatpush1.msra.mxu0 0.0
    %206 = vmatprep.subr.mxu0 0.0
    %207 = vmatpush1.msra.mxu0 0.0
    %208 = vmatprep.subr.mxu0 0.0
    %209 = vmatpush1.msra.mxu0 0.0
    %210 = vmatprep.subr.mxu0 0.0
    %211 = vmatpush1.msra.mxu0 0.0
    %212 = vmatprep.subr.mxu0 0.0
    %213 = vmatpush1.msra.mxu0 0.0
    %214 = vmatprep.subr.mxu0 0.0
    %215 = vmatpush1.msra.mxu0 0.0
    %216 = vmatprep.subr.mxu0 0.0
    %217 = vmatpush1.msra.mxu0 0.0
    %218 = vmatprep.subr.mxu0 0.0
    %219 = vmatpush1.msra.mxu0 0.0
    %220 = vmatprep.subr.mxu0 0.0
    %221 = vmatpush1.msra.mxu0 0.0
    %222 = vmatprep.subr.mxu0 0.0
    %223 = vmatpush1.msra.mxu0 0.0
    %224 = vmatprep.subr.mxu0 0.0
    %225 = vmatpush1.msra.mxu0 0.0
    %226 = vmatprep.subr.mxu0 0.0
    %227 = vmatpush1.msra.mxu0 0.0
    %228 = vmatprep.subr.mxu0 0.0
    %229 = vmatpush1.msra.mxu0 0.0
    %230 = vmatprep.subr.mxu0 0.0
    %231 = vmatpush1.msra.mxu0 0.0
    %232 = vmatprep.subr.mxu0 0.0
    %233 = vmatpush1.msra.mxu0 0.0
    %234 = vmatprep.subr.mxu0 0.0
    %235 = vmatpush1.msra.mxu0 0.0
    %236 = vmatprep.subr.mxu0 0.0
    %237 = vmatpush1.msra.mxu0 0.0
    %238 = vmatprep.subr.mxu0 0.0
    %239 = vmatpush1.msra.mxu0 0.0
    %240 = vmatprep.subr.mxu0 0.0
    %241 = vmatpush1.msra.mxu0 0.0
    %242 = vmatprep.subr.mxu0 0.0
    %243 = vmatpush1.msra.mxu0 0.0
    %244 = vmatprep.subr.mxu0 0.0
    %245 = vmatpush1.msra.mxu0 0.0
    %246 = vmatprep.subr.mxu0 0.0
    %247 = vmatpush1.msra.mxu0 0.0
    %248 = vmatprep.subr.mxu0 0.0
    %249 = vmatpush1.msra.mxu0 0.0
    %250 = vmatprep.subr.mxu0 0.0
    %251 = vmatpush1.msra.mxu0 0.0
    %252 = vmatprep.subr.mxu0 0.0
    %253 = vmatpush1.msra.mxu0 0.0
    %254 = vmatprep.subr.mxu0 0.0
    %255 = vmatpush1.msra.mxu0 0.0
    %256 = vmatprep.mubr.f32.mxu0 0.0
    %257 = vmatmul.mubr.f32.gmra.mrb[0].mxu0 %v34
    %v258 = vpop.f32.mrb[0].mxu0
    %v259 = vadd.f32 0.0, %v258
    %v260 = vpop.f32.mrb[0].mxu0
    %261 = vdwg.mxu0
    %v262 = vlaneseq
    %v263 = vshrl.u32 %v262, 7
    %v264 = vsub.s32 0, %v263
    %v265 = vrot.slane %v191, %v264
    %268 = vrot.lane.b32.xlu0 %v189, 112
    %v269 = vpop.permute.xlu0 %268
    %270 = vrot.lane.b32.xlu0 %v190, 112
    %v271 = vpop.permute.xlu0 %270
    %275 = vrot.lane.b32.xlu0 %v265, 112
    %v276 = vpop.permute.xlu0 %275
    %vm278 = vcmask 130048
    %v280 = vsel %vm278, %v259, 0
    %282 = vmatprep.subr.mxu0 0.0
    %283 = vmatpush1.msra.mxu0 %v269
    %284 = vmatprep.subr.mxu0 0.0
    %285 = vmatpush1.msra.mxu0 %v271
    %286 = vmatprep.subr.mxu0 0.0
    %287 = vmatpush1.msra.mxu0 0.0
    %288 = vmatprep.subr.mxu0 0.0
    %289 = vmatpush1.msra.mxu0 0.0
    %290 = vmatprep.subr.mxu0 0.0
    %291 = vmatpush1.msra.mxu0 0.0
    %292 = vmatprep.subr.mxu0 0.0
    %293 = vmatpush1.msra.mxu0 0.0
    %294 = vmatprep.subr.mxu0 0.0
    %295 = vmatpush1.msra.mxu0 0.0
    %296 = vmatprep.subr.mxu0 0.0
    %297 = vmatpush1.msra.mxu0 0.0
    %298 = vmatprep.subr.mxu0 0.0
    %299 = vmatpush1.msra.mxu0 0.0
    %300 = vmatprep.subr.mxu0 0.0
    %301 = vmatpush1.msra.mxu0 0.0
    %302 = vmatprep.subr.mxu0 0.0
    %303 = vmatpush1.msra.mxu0 0.0
    %304 = vmatprep.subr.mxu0 0.0
    %305 = vmatpush1.msra.mxu0 0.0
    %306 = vmatprep.subr.mxu0 0.0
    %307 = vmatpush1.msra.mxu0 0.0
    %308 = vmatprep.subr.mxu0 0.0
    %309 = vmatpush1.msra.mxu0 0.0
    %310 = vmatprep.subr.mxu0 0.0
    %311 = vmatpush1.msra.mxu0 0.0
    %312 = vmatprep.subr.mxu0 0.0
    %313 = vmatpush1.msra.mxu0 0.0
    %314 = vmatprep.subr.mxu0 0.0
    %315 = vmatpush1.msra.mxu0 0.0
    %316 = vmatprep.subr.mxu0 0.0
    %317 = vmatpush1.msra.mxu0 0.0
    %318 = vmatprep.subr.mxu0 0.0
    %319 = vmatpush1.msra.mxu0 0.0
    %320 = vmatprep.subr.mxu0 0.0
    %321 = vmatpush1.msra.mxu0 0.0
    %322 = vmatprep.subr.mxu0 0.0
    %323 = vmatpush1.msra.mxu0 0.0
    %324 = vmatprep.subr.mxu0 0.0
    %325 = vmatpush1.msra.mxu0 0.0
    %326 = vmatprep.subr.mxu0 0.0
    %327 = vmatpush1.msra.mxu0 0.0
    %328 = vmatprep.subr.mxu0 0.0
    %329 = vmatpush1.msra.mxu0 0.0
    %330 = vmatprep.subr.mxu0 0.0
    %331 = vmatpush1.msra.mxu0 0.0
    %332 = vmatprep.subr.mxu0 0.0
    %333 = vmatpush1.msra.mxu0 0.0
    %334 = vmatprep.subr.mxu0 0.0
    %335 = vmatpush1.msra.mxu0 0.0
    %336 = vmatprep.subr.mxu0 0.0
    %337 = vmatpush1.msra.mxu0 0.0
    %338 = vmatprep.subr.mxu0 0.0
    %339 = vmatpush1.msra.mxu0 0.0
    %340 = vmatprep.subr.mxu0 0.0
    %341 = vmatpush1.msra.mxu0 0.0
    %342 = vmatprep.subr.mxu0 0.0
    %343 = vmatpush1.msra.mxu0 0.0
    %344 = vmatprep.subr.mxu0 0.0
    %345 = vmatpush1.msra.mxu0 0.0
    %346 = vmatprep.mubr.f32.mxu0 0.0
    %347 = vmatmul.mubr.f32.gmra.mrb[0].mxu0 %v280
    %v348 = vpop.f32.mrb[0].mxu0
    %v349 = vadd.f32 %v276, %v348
    %v350 = vpop.f32.mrb[0].mxu0
    %351 = vdwg.mxu0
    %v352 = vmax.f32 %v349, 0.0
    %353 = vxpose.xlu0.b32.start [1/16] %v352, 128
    %354 = vxpose.xlu0.b32.cont [2/16] 0.0, 128
    %355 = vxpose.xlu0.b32.cont [3/16] 0.0, 128
    %356 = vxpose.xlu0.b32.cont [4/16] 0.0, 128
    %357 = vxpose.xlu0.b32.cont [5/16] 0.0, 128
    %358 = vxpose.xlu0.b32.cont [6/16] 0.0, 128
    %359 = vxpose.xlu0.b32.cont [7/16] 0.0, 128
    %360 = vxpose.xlu0.b32.cont [8/16] 0.0, 128
    %361 = vxpose.xlu0.b32.cont [9/16] 0.0, 128
    %362 = vxpose.xlu0.b32.cont [10/16] 0.0, 128
    %363 = vxpose.xlu0.b32.cont [11/16] 0.0, 128
    %364 = vxpose.xlu0.b32.cont [12/16] 0.0, 128
    %365 = vxpose.xlu0.b32.cont [13/16] 0.0, 128
    %366 = vxpose.xlu0.b32.cont [14/16] 0.0, 128
    %367 = vxpose.xlu0.b32.cont [15/16] 0.0, 128
    %368 = vxpose.xlu0.b32.end [16/16] 0.0, 128
    %v369 = vpop.trf.xlu0
    %v370 = vpop.trf.xlu0
    %v371 = vpop.trf.xlu0
    %v372 = vpop.trf.xlu0
    %v373 = vpop.trf.xlu0
    %v374 = vpop.trf.xlu0
    %v375 = vpop.trf.xlu0
    %v376 = vpop.trf.xlu0
    %v377 = vpop.trf.xlu0
    %v378 = vpop.trf.xlu0
    %v379 = vpop.trf.xlu0
    %v380 = vpop.trf.xlu0
    %v381 = vpop.trf.xlu0
    %v382 = vpop.trf.xlu0
    %v383 = vpop.trf.xlu0
    %v384 = vpop.trf.xlu0
    %385 = vst.msk [vmem:[%s3] sm:$0xff] %vm32, %v369
    %386 = vst.msk [vmem:[%s3 + $0x8] sm:$0xff] %vm32, %v370
    %387 = vst.msk [vmem:[%s3 + $0x10] sm:$0xff] %vm32, %v371
    %388 = vst.msk [vmem:[%s3 + $0x18] sm:$0xff] %vm32, %v372
    // Predicated region
    $region18: #{_grach_conv_call.1} parent=1 // pred_check
      _
    $region19: #{_grach_conv_call.1} parent=1 // pred_check_branch
      %390 = sbr.rel (0) target = $region21
    $region20: #{_grach_conv_call.1} parent=1 // pred_region
      _
    $region21: #{_grach_conv_call.1} parent=1 // pred_fallthru
      _
    // Predicated region
    $region22: #{_grach_conv_call.1} parent=1 // pred_check
      _
    $region23: #{_grach_conv_call.1} parent=1 // pred_check_branch
      %392 = sbr.rel (0) target = $region25
    $region24: #{_grach_conv_call.1} parent=1 // pred_region
      _
    $region25: #{_grach_conv_call.1} parent=1 // pred_fallthru
      _
    %393 = vsyncpa [#allocation3], 1

</llo_original>
